<compile_context>
chip_gen: v5e
topology: v5e:2x2
jax: 0.10.0
libtpu: 0.0.40
codegen_flags: <defaults>
</compile_context>

<pallas_src>
import functools

import numpy as np
import jax
import jax.numpy as jnp
from jax.experimental import pallas as pl
from jax.experimental.pallas import tpu as pltpu


def _pick_c_tile(C, dtype):
    """Channel tile: multiple of the sublane packing (8 f32 / 16 bf16) or full C."""
    sub = 16 if dtype == jnp.bfloat16 else 8
    if C <= 4 * sub:
        return C
    for cand in (4 * sub, 2 * sub, sub):
        if C % cand == 0:
            return cand
    return C  # awkward channel count: fall back to full extent


def _kd_kernel(coord_ref, s_cls_ref, t_cls_ref, s_wh_ref, t_wh_ref,
               out_ref, sq_acc, mask_acc, *, norm_wh, H, W):
    c_step = pl.program_id(1)
    last_c = pl.num_programs(1) - 1
    HW = H * W

    @pl.when(c_step == 0)
    def _init():
        sq_acc[...] = jnp.zeros_like(sq_acc)
        mask_acc[...] = jnp.zeros_like(mask_acc)

    s_cls = s_cls_ref[...].astype(jnp.float32)     # (tc, HW) student 'cls' slice
    t_cls = t_cls_ref[...].astype(jnp.float32)     # (tc, HW) teacher 'cls'

    # extra_conv: LeakyReLU(0.01) on 'cls' (max(x, 0.01x) == leaky_relu, a < 1)
    s_act = jnp.maximum(s_cls, 0.01 * s_cls)
    t_act = jnp.maximum(t_cls, 0.01 * t_cls)
    d = s_act - t_act
    sq_acc[...] += d * d   # pure-VPU per-pixel partials; reduced once at finalize

    # teacher 'mask_cls' = ReLU(teacher cls) (>= 0, required by the 0-pad trick)
    heat = jnp.maximum(t_cls, 0.0)

    # _nms: separable 3x3 / stride-1 / pad-1 max-pool on the (H, W) grid folded
    # into the lane axis.  Neighbours are XLU lane rolls (no VMEM round-trip):
    #   roll(+1)    -> (h, w-1)      roll(HW-1)  -> (h, w+1)
    #   roll(+W)    -> (h-1, w)      roll(HW-W)  -> (h+1, w)
    # Wrapped elements are neutralised with 0 (== -inf padding since heat >= 0
    # and the window centre is always included).
    col = coord_ref[0:1, :]        # (1, HW) int32 = p mod W  (precomputed, no vdiv)
    row = coord_ref[1:2, :]        # (1, HW) int32 = p // W

    left = jnp.where(col != 0, pltpu.roll(heat, 1, axis=1), 0.0)
    right = jnp.where(col != W - 1, pltpu.roll(heat, HW - 1, axis=1), 0.0)
    hmax_w = jnp.maximum(heat, jnp.maximum(left, right))

    up = jnp.where(row != 0, pltpu.roll(hmax_w, W, axis=1), 0.0)
    down = jnp.where(row != H - 1, pltpu.roll(hmax_w, HW - W, axis=1), 0.0)
    hmax = jnp.maximum(hmax_w, jnp.maximum(up, down))

    nms = jnp.where(hmax == heat, heat, 0.0)           # exact equality, as in torch
    # running max over the channel dim -> per-pixel wh_mask (1, HW)
    mask_acc[...] = jnp.maximum(mask_acc[...], jnp.max(nms, axis=0, keepdims=True))

    @pl.when(c_step == last_c)
    def _finalize():
        wh_mask = mask_acc[...]                        # (1, HW)
        s_wh = s_wh_ref[...].astype(jnp.float32)       # (Cw, HW), resident over c
        t_wh = t_wh_ref[...].astype(jnp.float32)
        if norm_wh:
            norm = jnp.sum(t_wh, axis=0, keepdims=True) * 0.5 + 0.0001
            # exact reciprocal (keeps rtol=2e-4); |(s-t)*m/n| == |s*m/n - t*m/n|
            scaled_mask = wh_mask * pl.reciprocal(norm)
        else:
            scaled_mask = wh_mask
        l1_sum = jnp.sum(jnp.abs((s_wh - t_wh) * scaled_mask))
        sq_sum = jnp.sum(sq_acc[...])
        mask_sum = jnp.sum(wh_mask)
        # Per-batch partial sums broadcast across 128 lanes (lane-dense store).
        # Cross-batch combine + loss weighting happen in the wrapper, so the
        # batch grid axis carries no state and stays "parallel" (megacore/v7x).
        out_ref[0:1, :] = jnp.full((1, 128), sq_sum, dtype=jnp.float32)
        out_ref[1:2, :] = jnp.full((1, 128), l1_sum, dtype=jnp.float32)
        out_ref[2:3, :] = jnp.full((1, 128), mask_sum, dtype=jnp.float32)


def kd_loss_pallas(student_output, teacher_output, idx, kd_cfg):
    s_idx = 0 if idx == 0 else kd_cfg["KD_CLS_INDEX"][idx - 1]
    e_index = kd_cfg["KD_CLS_INDEX"][idx]
    kd_weight = kd_cfg["KD_WEIGHT"][idx]
    kd_cls_weight = float(kd_weight * kd_cfg["KD_CLS_WEIGHT"][idx])
    kd_wh_weight = float(kd_weight * kd_cfg["KD_WH_WEIGHT"][idx])
    norm_wh = bool(kd_cfg["NORM_WH"][idx])

    # glue: channel slice of the student classification head (cfg bookkeeping)
    s_cls = student_output["cls"][:, s_idx:e_index, :, :]
    t_cls = teacher_output["cls"]
    s_wh = student_output["wh"]
    t_wh = teacher_output["wh"]

    N, C, H, W = t_cls.shape
    assert s_cls.shape[1] == C, (
        "KD_CLS_INDEX slice must match teacher cls channel count "
        "(the MSE mean denominator assumes it)")
    Cw = t_wh.shape[1]
    HW = H * W

    # lane-dense layout: fold (H, W) into a single lane axis
    s_cls3 = s_cls.reshape(N, C, HW)
    t_cls3 = t_cls.reshape(N, C, HW)
    s_wh3 = s_wh.reshape(N, Cw, HW)
    t_wh3 = t_wh.reshape(N, Cw, HW)

    # precomputed (col, row) pixel coordinates for the pool border masks
    lane = np.arange(HW, dtype=np.int32)
    coords = jnp.asarray(np.stack([lane % W, lane // W], axis=0))   # (2, HW) int32

    tc = _pick_c_tile(C, t_cls.dtype)
    c_steps = C // tc

    kernel = functools.partial(_kd_kernel, norm_wh=norm_wh, H=H, W=W)

    in_bytes = sum(int(a.size) * a.dtype.itemsize
                   for a in (s_cls3, t_cls3, s_wh3, t_wh3, coords))
    cost = pl.CostEstimate(
        flops=20 * N * C * HW + 10 * N * Cw * HW,
        transcendentals=0,
        bytes_accessed=in_bytes + N * 3 * 128 * 4,
    )

    partials = pl.pallas_call(
        kernel,
        grid=(N, c_steps),
        in_specs=[
            pl.BlockSpec((2, HW), lambda n, c: (0, 0)),             # coords (resident)
            pl.BlockSpec((None, tc, HW), lambda n, c: (n, c, 0)),   # student cls
            pl.BlockSpec((None, tc, HW), lambda n, c: (n, c, 0)),   # teacher cls
            pl.BlockSpec((None, Cw, HW), lambda n, c: (n, 0, 0)),   # student wh
            pl.BlockSpec((None, Cw, HW), lambda n, c: (n, 0, 0)),   # teacher wh
        ],
        out_specs=pl.BlockSpec((None, 3, 128), lambda n, c: (n, 0, 0)),
        out_shape=jax.ShapeDtypeStruct((N, 3, 128), jnp.float32),
        scratch_shapes=[
            pltpu.VMEM((tc, HW), jnp.float32),   # per-pixel squared-diff partials
            pltpu.VMEM((1, HW), jnp.float32),    # running channel-max (wh_mask)
        ],
        compiler_params=pltpu.CompilerParams(
            # batch axis is stateless per-block -> parallel (uses both v7x TCs);
            # channel axis carries the accumulators -> arbitrary (reduction)
            dimension_semantics=("parallel", "arbitrary"),
        ),
        cost_estimate=cost,
    )(coords, s_cls3, t_cls3, s_wh3, t_wh3)

    # tiny cross-batch combine + weighting (all 128 lanes hold the same value)
    sq_sum = jnp.sum(partials[:, 0, 0])
    l1_sum = jnp.sum(partials[:, 1, 0])
    mask_sum = jnp.sum(partials[:, 2, 0])

    cls_loss = sq_sum * (kd_cls_weight / float(N * C * H * W))
    wh_loss = l1_sum * kd_wh_weight / (mask_sum + 0.0001)
    return {f"kd_cls_loss{idx}": cls_loss, f"kd_wh_loss{idx}": wh_loss}


def kd_loss_ref(student_output, teacher_output, idx, kd_cfg):
    """Pure-JAX reference mirroring the PyTorch module (for verification)."""
    s_idx = 0 if idx == 0 else kd_cfg["KD_CLS_INDEX"][idx - 1]
    e_index = kd_cfg["KD_CLS_INDEX"][idx]
    kd_weight = kd_cfg["KD_WEIGHT"][idx]
    kd_cls_weight = kd_weight * kd_cfg["KD_CLS_WEIGHT"][idx]
    kd_wh_weight = kd_weight * kd_cfg["KD_WH_WEIGHT"][idx]
    norm_wh = kd_cfg["NORM_WH"][idx]

    lrelu = lambda x: jnp.where(x > 0, x, 0.01 * x)
    s_cls = lrelu(student_output["cls"])[:, s_idx:e_index]
    t_cls = lrelu(teacher_output["cls"])
    mask_cls = jnp.maximum(teacher_output["cls"], 0.0)

    hmax = jax.lax.reduce_window(mask_cls, -jnp.inf, jax.lax.max,
                                 (1, 1, 3, 3), (1, 1, 1, 1),
                                 [(0, 0), (0, 0), (1, 1), (1, 1)])
    nms = mask_cls * (hmax == mask_cls).astype(jnp.float32)
    wh_mask = jnp.max(nms, axis=1, keepdims=True)
    mask_weight = jnp.sum(wh_mask) + 0.0001

    kd_cls_loss = jnp.mean((s_cls - t_cls) ** 2) * kd_cls_weight
    s_wh = student_output["wh"]
    t_wh = teacher_output["wh"]
    norm = (jnp.sum(t_wh, axis=1, keepdims=True) / 2.0 + 0.0001) if norm_wh else 1.0
    kd_wh_loss = (jnp.sum(jnp.abs(s_wh * wh_mask / norm - t_wh * wh_mask / norm))
                  / mask_weight) * kd_wh_weight
    return {f"kd_cls_loss{idx}": kd_cls_loss, f"kd_wh_loss{idx}": kd_wh_loss}


if __name__ == "__main__":
    # Deterministic synthetic cfg (cfg.MODEL.CENTERNET.KD).  The module has no
    # learnable parameters (MSE/L1/MaxPool/ReLU), so these are the only "params".
    kd_cfg = {
        "KD_CLS_INDEX": [4, 8],
        "KD_WEIGHT": [1.0, 0.5],
        "KD_CLS_WEIGHT": [1.0, 2.0],
        "KD_WH_WEIGHT": [1.0, 1.5],
        "NORM_WH": [True, False],
    }

    N, Cs, Ct, Cw, H, W = 2, 8, 4, 4, 16, 16
    key = jax.random.PRNGKey(0)
    k1, k2, k3, k4 = jax.random.split(key, 4)
    student_output = {
        "cls": jax.random.normal(k1, (N, Cs, H, W), dtype=jnp.float32),
        "wh": jax.random.normal(k2, (N, Cw, H, W), dtype=jnp.float32),
    }
    teacher_output = {
        "cls": jax.random.normal(k3, (N, Ct, H, W), dtype=jnp.float32),
        "wh": jax.random.normal(k4, (N, Cw, H, W), dtype=jnp.float32),
    }

    # f32 path: algorithmic check against the pure-JAX reference
    for idx in (0, 1):
        out = kd_loss_pallas(student_output, teacher_output, idx, kd_cfg)
        jax.block_until_ready(out)
        ref = kd_loss_ref(student_output, teacher_output, idx, kd_cfg)
        for k in out:
            assert jnp.allclose(out[k], ref[k], rtol=2e-4, atol=1e-5), (
                k, out[k], ref[k])

    # bf16 streaming path: kernel upcasts after load (halves HBM bytes); the
    # reference runs on the same bf16-rounded values upcast to f32.
    student_bf16 = {k: v.astype(jnp.bfloat16) for k, v in student_output.items()}
    teacher_bf16 = {k: v.astype(jnp.bfloat16) for k, v in teacher_output.items()}
    student_ref = {k: v.astype(jnp.float32) for k, v in student_bf16.items()}
    teacher_ref = {k: v.astype(jnp.float32) for k, v in teacher_bf16.items()}
    for idx in (0, 1):
        out = kd_loss_pallas(student_bf16, teacher_bf16, idx, kd_cfg)
        jax.block_until_ready(out)
        ref = kd_loss_ref(student_ref, teacher_ref, idx, kd_cfg)
        for k in out:
            assert jnp.allclose(out[k], ref[k], rtol=2e-3, atol=1e-4), (
                k, out[k], ref[k])

    print("KERNEL_OK")
</pallas_src>

<mosaic_0001>
module attributes {stable_mosaic.version = 11 : i64} {
  func.func @_kd_kernel(%arg0: i32, %arg1: i32, %arg2: memref<2x256xi32, #tpu.memory_space<vmem>>, %arg3: memref<1x4x256xf32, #tpu.memory_space<vmem>>, %arg4: memref<1x4x256xf32, #tpu.memory_space<vmem>>, %arg5: memref<1x4x256xf32, #tpu.memory_space<vmem>>, %arg6: memref<1x4x256xf32, #tpu.memory_space<vmem>>, %arg7: memref<1x3x128xf32, #tpu.memory_space<vmem>>, %arg8: memref<4x256xf32, #tpu.memory_space<vmem>>, %arg9: memref<1x256xf32, #tpu.memory_space<vmem>>) attributes {dimension_semantics = [#tpu.dimension_semantics<parallel>, #tpu.dimension_semantics<arbitrary>], iteration_bounds = array<i64: 2, 1>, scalar_prefetch = 0 : i64, scratch_operands = 2 : i64, tpu.core_type = #tpu.core_type<tc>, window_params = [{pipeline_mode = #tpu.pipeline_mode<synchronous>, transform_indices = @transform_0, window_bounds = array<i64: 2, 256>}, {transform_indices = @transform_1, window_bounds = array<i64: 1, 4, 256>}, {transform_indices = @transform_2, window_bounds = array<i64: 1, 4, 256>}, {transform_indices = @transform_3, window_bounds = array<i64: 1, 4, 256>}, {transform_indices = @transform_4, window_bounds = array<i64: 1, 4, 256>}, {transform_indices = @transform_5, window_bounds = array<i64: 1, 3, 128>}]} {
    %c0_i32 = arith.constant 0 : i32
    %0 = arith.cmpi eq, %arg1, %c0_i32 : i32
    %1 = arith.extui %0 : i1 to i32
    %c0_i32_0 = arith.constant 0 : i32
    %2 = arith.cmpi ne, %1, %c0_i32_0 : i32
    scf.if %2 {
      %cst_30 = arith.constant 0.000000e+00 : f32
      %65 = vector.broadcast %cst_30 : f32 to vector<4x256xf32>
      %c0_31 = arith.constant 0 : index
      %c0_32 = arith.constant 0 : index
      %66 = vector.load %arg8[%c0_31, %c0_32] : memref<4x256xf32, #tpu.memory_space<vmem>>, vector<4x256xf32>
      tpu.vector_store %arg8[%c0_31, %c0_32], %65 {strides = array<i32>} : memref<4x256xf32, #tpu.memory_space<vmem>>, vector<4x256xf32>,
      %cst_33 = arith.constant 0.000000e+00 : f32
      %67 = vector.broadcast %cst_33 : f32 to vector<1x256xf32>
      %c0_34 = arith.constant 0 : index
      %c0_35 = arith.constant 0 : index
      %68 = vector.load %arg9[%c0_34, %c0_35] : memref<1x256xf32, #tpu.memory_space<vmem>>, vector<1x256xf32>
      tpu.vector_store %arg9[%c0_34, %c0_35], %67 {strides = array<i32>} : memref<1x256xf32, #tpu.memory_space<vmem>>, vector<1x256xf32>,
    } else {
    }
    %c0 = arith.constant 0 : index
    %c0_1 = arith.constant 0 : index
    %c0_2 = arith.constant 0 : index
    %3 = vector.load %arg3[%c0, %c0_1, %c0_2] : memref<1x4x256xf32, #tpu.memory_space<vmem>>, vector<1x4x256xf32>
    %4 = vector.shape_cast %3 : vector<1x4x256xf32> to vector<4x256xf32>
    %c0_3 = arith.constant 0 : index
    %c0_4 = arith.constant 0 : index
    %c0_5 = arith.constant 0 : index
    %5 = vector.load %arg4[%c0_3, %c0_4, %c0_5] : memref<1x4x256xf32, #tpu.memory_space<vmem>>, vector<1x4x256xf32>
    %6 = vector.shape_cast %5 : vector<1x4x256xf32> to vector<4x256xf32>
    %cst = arith.constant 0.00999999977 : f32
    %7 = vector.broadcast %cst : f32 to vector<4x256xf32>
    %8 = arith.mulf %7, %4 : vector<4x256xf32>
    %9 = arith.maximumf %4, %8 : vector<4x256xf32>
    %cst_6 = arith.constant 0.00999999977 : f32
    %10 = vector.broadcast %cst_6 : f32 to vector<4x256xf32>
    %11 = arith.mulf %10, %6 : vector<4x256xf32>
    %12 = arith.maximumf %6, %11 : vector<4x256xf32>
    %13 = arith.subf %9, %12 : vector<4x256xf32>
    %c0_7 = arith.constant 0 : index
    %c0_8 = arith.constant 0 : index
    %14 = vector.load %arg8[%c0_7, %c0_8] : memref<4x256xf32, #tpu.memory_space<vmem>>, vector<4x256xf32>
    %15 = arith.mulf %13, %13 : vector<4x256xf32>
    %16 = arith.addf %14, %15 : vector<4x256xf32>
    %c0_9 = arith.constant 0 : index
    %c0_10 = arith.constant 0 : index
    %17 = vector.load %arg8[%c0_9, %c0_10] : memref<4x256xf32, #tpu.memory_space<vmem>>, vector<4x256xf32>
    tpu.vector_store %arg8[%c0_9, %c0_10], %16 {strides = array<i32>} : memref<4x256xf32, #tpu.memory_space<vmem>>, vector<4x256xf32>,
    %cst_11 = arith.constant 0.000000e+00 : f32
    %18 = vector.broadcast %cst_11 : f32 to vector<4x256xf32>
    %19 = arith.maximumf %6, %18 : vector<4x256xf32>
    %c0_12 = arith.constant 0 : index
    %c0_13 = arith.constant 0 : index
    %20 = vector.load %arg2[%c0_12, %c0_13] : memref<2x256xi32, #tpu.memory_space<vmem>>, vector<1x256xi32>
    %c1 = arith.constant 1 : index
    %c0_14 = arith.constant 0 : index
    %21 = vector.load %arg2[%c1, %c0_14] : memref<2x256xi32, #tpu.memory_space<vmem>>, vector<1x256xi32>
    %c0_i32_15 = arith.constant 0 : i32
    %22 = vector.broadcast %c0_i32_15 : i32 to vector<1x256xi32>
    %23 = arith.cmpi ne, %20, %22 : vector<1x256xi32>
    %c1_i32 = arith.constant 1 : i32
    %24 = tpu.dynamic_rotate %19 by %c1_i32 dim 1 : vector<4x256xf32>, i32 -> vector<4x256xf32>
    %cst_16 = arith.constant 0.000000e+00 : f32
    %25 = vector.shape_cast %23 : vector<1x256xi1> to vector<1x256xi1>
    %26 = vector.broadcast %25 : vector<1x256xi1> to vector<4x256xi1>
    %27 = vector.broadcast %cst_16 : f32 to vector<4x256xf32>
    %28 = arith.select %26, %24, %27 : vector<4x256xi1>, vector<4x256xf32>
    %c15_i32 = arith.constant 15 : i32
    %29 = vector.broadcast %c15_i32 : i32 to vector<1x256xi32>
    %30 = arith.cmpi ne, %20, %29 : vector<1x256xi32>
    %c255_i32 = arith.constant 255 : i32
    %31 = tpu.dynamic_rotate %19 by %c255_i32 dim 1 : vector<4x256xf32>, i32 -> vector<4x256xf32>
    %cst_17 = arith.constant 0.000000e+00 : f32
    %32 = vector.shape_cast %30 : vector<1x256xi1> to vector<1x256xi1>
    %33 = vector.broadcast %32 : vector<1x256xi1> to vector<4x256xi1>
    %34 = vector.broadcast %cst_17 : f32 to vector<4x256xf32>
    %35 = arith.select %33, %31, %34 : vector<4x256xi1>, vector<4x256xf32>
    %36 = arith.maximumf %28, %35 : vector<4x256xf32>
    %37 = arith.maximumf %19, %36 : vector<4x256xf32>
    %c0_i32_18 = arith.constant 0 : i32
    %38 = vector.broadcast %c0_i32_18 : i32 to vector<1x256xi32>
    %39 = arith.cmpi ne, %21, %38 : vector<1x256xi32>
    %c16_i32 = arith.constant 16 : i32
    %40 = tpu.dynamic_rotate %37 by %c16_i32 dim 1 : vector<4x256xf32>, i32 -> vector<4x256xf32>
    %cst_19 = arith.constant 0.000000e+00 : f32
    %41 = vector.shape_cast %39 : vector<1x256xi1> to vector<1x256xi1>
    %42 = vector.broadcast %41 : vector<1x256xi1> to vector<4x256xi1>
    %43 = vector.broadcast %cst_19 : f32 to vector<4x256xf32>
    %44 = arith.select %42, %40, %43 : vector<4x256xi1>, vector<4x256xf32>
    %c15_i32_20 = arith.constant 15 : i32
    %45 = vector.broadcast %c15_i32_20 : i32 to vector<1x256xi32>
    %46 = arith.cmpi ne, %21, %45 : vector<1x256xi32>
    %c240_i32 = arith.constant 240 : i32
    %47 = tpu.dynamic_rotate %37 by %c240_i32 dim 1 : vector<4x256xf32>, i32 -> vector<4x256xf32>
    %cst_21 = arith.constant 0.000000e+00 : f32
    %48 = vector.shape_cast %46 : vector<1x256xi1> to vector<1x256xi1>
    %49 = vector.broadcast %48 : vector<1x256xi1> to vector<4x256xi1>
    %50 = vector.broadcast %cst_21 : f32 to vector<4x256xf32>
    %51 = arith.select %49, %47, %50 : vector<4x256xi1>, vector<4x256xf32>
    %52 = arith.maximumf %44, %51 : vector<4x256xf32>
    %53 = arith.maximumf %37, %52 : vector<4x256xf32>
    %54 = arith.cmpf oeq, %53, %19 : vector<4x256xf32>
    %cst_22 = arith.constant 0.000000e+00 : f32
    %55 = vector.broadcast %cst_22 : f32 to vector<4x256xf32>
    %56 = arith.select %54, %19, %55 : vector<4x256xi1>, vector<4x256xf32>
    %c0_23 = arith.constant 0 : index
    %c0_24 = arith.constant 0 : index
    %57 = vector.load %arg9[%c0_23, %c0_24] : memref<1x256xf32, #tpu.memory_space<vmem>>, vector<1x256xf32>
    %cst_25 = arith.constant dense<0xFF800000> : vector<256xf32>
    %58 = vector.multi_reduction <maximumf>, %56, %cst_25 [0] : vector<4x256xf32> to vector<256xf32>
    %59 = vector.shape_cast %58 : vector<256xf32> to vector<1x256xf32>
    %60 = arith.maximumf %57, %59 : vector<1x256xf32>
    %c0_26 = arith.constant 0 : index
    %c0_27 = arith.constant 0 : index
    %61 = vector.load %arg9[%c0_26, %c0_27] : memref<1x256xf32, #tpu.memory_space<vmem>>, vector<1x256xf32>
    tpu.vector_store %arg9[%c0_26, %c0_27], %60 {strides = array<i32>} : memref<1x256xf32, #tpu.memory_space<vmem>>, vector<1x256xf32>,
    %c0_i32_28 = arith.constant 0 : i32
    %62 = arith.cmpi eq, %arg1, %c0_i32_28 : i32
    %63 = arith.extui %62 : i1 to i32
    %c0_i32_29 = arith.constant 0 : i32
    %64 = arith.cmpi ne, %63, %c0_i32_29 : i32
    scf.if %64 {
      %c0_30 = arith.constant 0 : index
      %c0_31 = arith.constant 0 : index
      %65 = vector.load %arg9[%c0_30, %c0_31] : memref<1x256xf32, #tpu.memory_space<vmem>>, vector<1x256xf32>
      %c0_32 = arith.constant 0 : index
      %c0_33 = arith.constant 0 : index
      %c0_34 = arith.constant 0 : index
      %66 = vector.load %arg5[%c0_32, %c0_33, %c0_34] : memref<1x4x256xf32, #tpu.memory_space<vmem>>, vector<1x4x256xf32>
      %67 = vector.shape_cast %66 : vector<1x4x256xf32> to vector<4x256xf32>
      %c0_35 = arith.constant 0 : index
      %c0_36 = arith.constant 0 : index
      %c0_37 = arith.constant 0 : index
      %68 = vector.load %arg6[%c0_35, %c0_36, %c0_37] : memref<1x4x256xf32, #tpu.memory_space<vmem>>, vector<1x4x256xf32>
      %69 = vector.shape_cast %68 : vector<1x4x256xf32> to vector<4x256xf32>
      %cst_38 = arith.constant dense<0.000000e+00> : vector<256xf32>
      %70 = vector.multi_reduction <add>, %69, %cst_38 [0] : vector<4x256xf32> to vector<256xf32>
      %71 = vector.shape_cast %70 : vector<256xf32> to vector<1x256xf32>
      %cst_39 = arith.constant 5.000000e-01 : f32
      %72 = vector.broadcast %cst_39 : f32 to vector<1x256xf32>
      %73 = arith.mulf %71, %72 : vector<1x256xf32>
      %cst_40 = arith.constant 9.99999974E-5 : f32
      %74 = vector.broadcast %cst_40 : f32 to vector<1x256xf32>
      %75 = arith.addf %73, %74 : vector<1x256xf32>
      %76 = tpu.reciprocal %75 : vector<1x256xf32> -> vector<1x256xf32>
      %77 = arith.mulf %65, %76 : vector<1x256xf32>
      %78 = arith.subf %67, %69 : vector<4x256xf32>
      %79 = vector.broadcast %77 : vector<1x256xf32> to vector<4x256xf32>
      %80 = arith.mulf %78, %79 : vector<4x256xf32>
      %81 = math.absf %80 : vector<4x256xf32>
      %82 = vector.shape_cast %81 : vector<4x256xf32> to vector<1x4x256xf32>
      %cst_41 = arith.constant dense<0.000000e+00> : vector<1xf32>
      %83 = vector.multi_reduction <add>, %82, %cst_41 [1, 2] : vector<1x4x256xf32> to vector<1xf32>
      %84 = vector.shape_cast %83 : vector<1xf32> to vector<1x1x1xf32>
      %85 = vector.extract %84[0, 0, 0] : f32 from vector<1x1x1xf32>
      %c0_42 = arith.constant 0 : index
      %c0_43 = arith.constant 0 : index
      %86 = vector.load %arg8[%c0_42, %c0_43] : memref<4x256xf32, #tpu.memory_space<vmem>>, vector<4x256xf32>
      %87 = vector.shape_cast %86 : vector<4x256xf32> to vector<1x4x256xf32>
      %cst_44 = arith.constant dense<0.000000e+00> : vector<1xf32>
      %88 = vector.multi_reduction <add>, %87, %cst_44 [1, 2] : vector<1x4x256xf32> to vector<1xf32>
      %89 = vector.shape_cast %88 : vector<1xf32> to vector<1x1x1xf32>
      %90 = vector.extract %89[0, 0, 0] : f32 from vector<1x1x1xf32>
      %91 = vector.shape_cast %65 : vector<1x256xf32> to vector<1x1x256xf32>
      %cst_45 = arith.constant dense<0.000000e+00> : vector<1xf32>
      %92 = vector.multi_reduction <add>, %91, %cst_45 [1, 2] : vector<1x1x256xf32> to vector<1xf32>
      %93 = vector.shape_cast %92 : vector<1xf32> to vector<1x1x1xf32>
      %94 = vector.extract %93[0, 0, 0] : f32 from vector<1x1x1xf32>
      %95 = vector.broadcast %90 : f32 to vector<1x128xf32>
      %c0_46 = arith.constant 0 : index
      %c0_47 = arith.constant 0 : index
      %c0_48 = arith.constant 0 : index
      %96 = vector.load %arg7[%c0_46, %c0_47, %c0_48] : memref<1x3x128xf32, #tpu.memory_space<vmem>>, vector<1x1x128xf32>
      %97 = vector.shape_cast %96 : vector<1x1x128xf32> to vector<1x128xf32>
      %98 = vector.shape_cast %95 : vector<1x128xf32> to vector<1x1x128xf32>
      tpu.vector_store %arg7[%c0_46, %c0_47, %c0_48], %98 {strides = array<i32>} : memref<1x3x128xf32, #tpu.memory_space<vmem>>, vector<1x1x128xf32>,
      %99 = vector.broadcast %85 : f32 to vector<1x128xf32>
      %c0_49 = arith.constant 0 : index
      %c1_50 = arith.constant 1 : index
      %c0_51 = arith.constant 0 : index
      %100 = vector.load %arg7[%c0_49, %c1_50, %c0_51] : memref<1x3x128xf32, #tpu.memory_space<vmem>>, vector<1x1x128xf32>
      %101 = vector.shape_cast %100 : vector<1x1x128xf32> to vector<1x128xf32>
      %102 = vector.shape_cast %99 : vector<1x128xf32> to vector<1x1x128xf32>
      tpu.vector_store %arg7[%c0_49, %c1_50, %c0_51], %102 {strides = array<i32>} : memref<1x3x128xf32, #tpu.memory_space<vmem>>, vector<1x1x128xf32>,
      %103 = vector.broadcast %94 : f32 to vector<1x128xf32>
      %c0_52 = arith.constant 0 : index
      %c2 = arith.constant 2 : index
      %c0_53 = arith.constant 0 : index
      %104 = vector.load %arg7[%c0_52, %c2, %c0_53] : memref<1x3x128xf32, #tpu.memory_space<vmem>>, vector<1x1x128xf32>
      %105 = vector.shape_cast %104 : vector<1x1x128xf32> to vector<1x128xf32>
      %106 = vector.shape_cast %103 : vector<1x128xf32> to vector<1x1x128xf32>
      tpu.vector_store %arg7[%c0_52, %c2, %c0_53], %106 {strides = array<i32>} : memref<1x3x128xf32, #tpu.memory_space<vmem>>, vector<1x1x128xf32>,
    } else {
    }
    return
  }
  func.func @transform_0(%arg0: i32, %arg1: i32) -> (i32, i32) {
    %c0_i32 = arith.constant 0 : i32
    %c0_i32_0 = arith.constant 0 : i32
    %c0_i32_1 = arith.constant 0 : i32
    return %c0_i32, %c0_i32_0 : i32, i32
  }
  func.func @transform_1(%arg0: i32, %arg1: i32) -> (i32, i32, i32) {
    %c0_i32 = arith.constant 0 : i32
    %c0_i32_0 = arith.constant 0 : i32
    return %arg0, %arg1, %c0_i32 : i32, i32, i32
  }
  func.func @transform_2(%arg0: i32, %arg1: i32) -> (i32, i32, i32) {
    %c0_i32 = arith.constant 0 : i32
    %c0_i32_0 = arith.constant 0 : i32
    return %arg0, %arg1, %c0_i32 : i32, i32, i32
  }
  func.func @transform_3(%arg0: i32, %arg1: i32) -> (i32, i32, i32) {
    %c0_i32 = arith.constant 0 : i32
    %c0_i32_0 = arith.constant 0 : i32
    %c0_i32_1 = arith.constant 0 : i32
    return %arg0, %c0_i32, %c0_i32_0 : i32, i32, i32
  }
  func.func @transform_4(%arg0: i32, %arg1: i32) -> (i32, i32, i32) {
    %c0_i32 = arith.constant 0 : i32
    %c0_i32_0 = arith.constant 0 : i32
    %c0_i32_1 = arith.constant 0 : i32
    return %arg0, %c0_i32, %c0_i32_0 : i32, i32, i32
  }
  func.func @transform_5(%arg0: i32, %arg1: i32) -> (i32, i32, i32) {
    %c0_i32 = arith.constant 0 : i32
    %c0_i32_0 = arith.constant 0 : i32
    %c0_i32_1 = arith.constant 0 : i32
    return %arg0, %c0_i32, %c0_i32_0 : i32, i32, i32
  }
}

</mosaic_0001>

<llo_original>
// kernel: tpu_custom_call.1
$region0: #{tpu_custom_call.1}
  #allocation0 [shape = 'u32[]', space=smem, size = 0x4, offset = 0x4, fixed_abs, tag = 'smem constant byte address 0x4 - core index']
  #allocation1 [shape = 'u32[72,128]{1,0:T(1,128)}', space=vmem, size = 0x9000, scoped, tag = 'internal scratch']
  #allocation2 [shape = 'f32[4,256]{1,0:T(4,128)}', space=vmem, size = 0x1000, scoped, tag = 'scratch operand']
  #allocation3 [shape = 'f32[1,256]{1,0:T(1,128)}', space=vmem, size = 0x400, scoped, tag = 'scratch operand']
  %s0 = inlined_call_operand.hbm [shape: s32[2,256], index: 0, kind: input, shape index: {}]
  %s1 = inlined_call_operand.hbm [shape: f32[2,4,256], index: 1, kind: input, shape index: {}]
  %s2 = inlined_call_operand.hbm [shape: f32[2,4,256], index: 2, kind: input, shape index: {}]
  %s3 = inlined_call_operand.hbm [shape: f32[2,4,256], index: 3, kind: input, shape index: {}]
  %s4 = inlined_call_operand.hbm [shape: f32[2,4,256], index: 4, kind: input, shape index: {}]
  %s5 = inlined_call_operand.vmem [shape: f32[2,3,128], index: 5, kind: output, shape index: {}]
  %s6 = sld [smem:[#allocation0]]
  $region81: #{tpu_custom_call.1} parent=0
    _
  %s8 = ssub.s32 1, %s6
  %s9 = scalar_select 0, %s8, %s6
  $region1: #{tpu_custom_call.1} parent=0
    #allocation4 [shape = 'u8[2048]{0}', space=vmem, size = 0x800, scoped, tag = 'input window, operand 0, single buffered']
    #allocation5 [shape = 's32[2]{0}', space=sflag, size = 0x8, scoped, tag = 'scoped memory for tpu_custom_call.1']
    #allocation6 [shape = 'u8[8192]{0}', space=vmem, size = 0x2000, scoped, tag = 'input window, operand 1']
    #allocation7 [shape = 's32[2]{0}', space=sflag, size = 0x8, scoped, tag = 'scoped memory for tpu_custom_call.1']
    #allocation8 [shape = 'u8[8192]{0}', space=vmem, size = 0x2000, scoped, tag = 'input window, operand 2']
    #allocation9 [shape = 'u8[8192]{0}', space=vmem, size = 0x2000, scoped, tag = 'input window, operand 3']
    #allocation10 [shape = 's32[2]{0}', space=sflag, size = 0x8, scoped, tag = 'scoped memory for tpu_custom_call.1']
    #allocation11 [shape = 'u8[8192]{0}', space=vmem, size = 0x2000, scoped, tag = 'input window, operand 4']
    %10 = vsyncpa [#allocation5], 0
    %11 = vsyncpa [#allocation7], 0
    %s12 = scalar_lea.sflag [#allocation7], 1
    %13 = vsyncpa %s12, 0
    %14 = vsyncpa [#allocation10], 0
    %s15 = scalar_lea.sflag [#allocation10], 1
    %16 = vsyncpa %s15, 0
    loop: start=0, step=1, limit=4
    $region2: #{tpu_custom_call.1} parent=1 // loop_pre_header
      _
    $region3: #{tpu_custom_call.1} parent=1 // loop_header
      %s18 = sphi 0, %s22
      %p19 = scmp.ge.s32.totalorder %s18, 4
      %s25 = sphi 0, %s37
      %s26 = sphi 0, %s33
      %s27 = sphi 0, %s25
      %s28 = sphi 0, %s26
      %s29 = sphi 0, %s27
      %s30 = sphi 0, %s28
      %s38 = sphi 0, %s38
      %s40 = sphi 0, %s38
      %s41 = sphi 0, %s40
      %s55 = sphi 0, %s41
      %s63 = sphi 0, %s65
      %s66 = sphi 0, %s63
      %s67 = sphi 0, %s66
      %s83 = sphi 0, %s67
      %s91 = sphi 0, %s93
      %s94 = sphi 0, %s91
      %s95 = sphi 0, %s94
      %s111 = sphi 0, %s95
      %s117 = sphi 0, %s119
      %s120 = sphi 0, %s117
      %s121 = sphi 0, %s120
      %s137 = sphi 0, %s121
      %s143 = sphi 0, %s145
      %s146 = sphi 0, %s143
      %s147 = sphi 0, %s146
      %s163 = sphi 0, %s147
      %s169 = sphi 0, %s171
      %s172 = sphi 0, %s169
      %s173 = sphi 0, %s172
      %s189 = sphi 0, %s173
    $region4: #{tpu_custom_call.1} parent=1 // loop_header_branch
      %21 = sbr.rel (%p19) target = $region8
    $region5: #{tpu_custom_call.1} parent=1 // loop_body
      %s23 = ssub.s32 %s18, 1
      %s24 = ssub.s32 %s18, 2
      %s31 = sadd.s32 1, %s26
      %p32 = scmp.ge.s32.totalorder %s31, 1
      %s33 = scalar_select %p32, 0, %s31
      %s34 = sadd.s32 1, %s25
      %s35 = scalar_select %p32, %s34, %s25
      %p36 = scmp.ge.s32.totalorder %s35, 2
      %s37 = scalar_select %p36, 0, %s35
      %s39 = sadd.s32 %s38, 1
      %p42 = scmp.eq.s32.totalorder %s18, 1
      %p43 = scmp.ne.s32.totalorder %s38, %s40
      %p44 = scmp.eq.s32.totalorder %s18, 0
      %p45 = por %p43, %p44
      %p46 = scmp.ne.s32.totalorder %s38, %s40
      %p47 = scmp.eq.s32.totalorder %s23, 1
      %p48 = por %p46, %p47
      %p49 = scmp.ne.s32.totalorder %s40, %s41
      %p50 = scmp.eq.s32.totalorder %s23, 0
      %p51 = por %p49, %p50
      %p52 = scmp.ne.s32.totalorder %s40, %s41
      %p53 = scmp.eq.s32.totalorder %s24, 1
      %p54 = por %p52, %p53
      %p56 = scmp.ne.s32.totalorder %s41, %s55
      %p57 = scmp.eq.s32.totalorder %s24, 0
      %p58 = por %p56, %p57
      %s59 = ssub.s32 %s25, %s37
      %s60 = ssub.s32 %s26, %s33
      %s61 = sor.u32 %s59, %s60
      %p62 = scmp.eq.s32.totalorder %s61, 0
      %s64 = sadd.s32 %s63, 1
      %s65 = scalar_select %p62, %s63, %s64
      %p68 = pneg %p62
      %p69 = scmp.eq.s32.totalorder %s18, 1
      %p70 = por %p68, %p69
      %p71 = scmp.ne.s32.totalorder %s63, %s66
      %p72 = scmp.eq.s32.totalorder %s18, 0
      %p73 = por %p71, %p72
      %p74 = scmp.ne.s32.totalorder %s63, %s66
      %p75 = scmp.eq.s32.totalorder %s23, 1
      %p76 = por %p74, %p75
      %p77 = scmp.ne.s32.totalorder %s66, %s67
      %p78 = scmp.eq.s32.totalorder %s23, 0
      %p79 = por %p77, %p78
      %p80 = scmp.ne.s32.totalorder %s66, %s67
      %p81 = scmp.eq.s32.totalorder %s24, 1
      %p82 = por %p80, %p81
      %p84 = scmp.ne.s32.totalorder %s67, %s83
      %p85 = scmp.eq.s32.totalorder %s24, 0
      %p86 = por %p84, %p85
      %s87 = ssub.s32 %s25, %s37
      %s88 = ssub.s32 %s26, %s33
      %s89 = sor.u32 %s87, %s88
      %p90 = scmp.eq.s32.totalorder %s89, 0
      %s92 = sadd.s32 %s91, 1
      %s93 = scalar_select %p90, %s91, %s92
      %p96 = pneg %p90
      %p97 = scmp.eq.s32.totalorder %s18, 1
      %p98 = por %p96, %p97
      %p99 = scmp.ne.s32.totalorder %s91, %s94
      %p100 = scmp.eq.s32.totalorder %s18, 0
      %p101 = por %p99, %p100
      %p102 = scmp.ne.s32.totalorder %s91, %s94
      %p103 = scmp.eq.s32.totalorder %s23, 1
      %p104 = por %p102, %p103
      %p105 = scmp.ne.s32.totalorder %s94, %s95
      %p106 = scmp.eq.s32.totalorder %s23, 0
      %p107 = por %p105, %p106
      %p108 = scmp.ne.s32.totalorder %s94, %s95
      %p109 = scmp.eq.s32.totalorder %s24, 1
      %p110 = por %p108, %p109
      %p112 = scmp.ne.s32.totalorder %s95, %s111
      %p113 = scmp.eq.s32.totalorder %s24, 0
      %p114 = por %p112, %p113
      %s115 = ssub.s32 %s25, %s37
      %p116 = scmp.eq.s32.totalorder %s115, 0
      %s118 = sadd.s32 %s117, 1
      %s119 = scalar_select %p116, %s117, %s118
      %p122 = pneg %p116
      %p123 = scmp.eq.s32.totalorder %s18, 1
      %p124 = por %p122, %p123
      %p125 = scmp.ne.s32.totalorder %s117, %s120
      %p126 = scmp.eq.s32.totalorder %s18, 0
      %p127 = por %p125, %p126
      %p128 = scmp.ne.s32.totalorder %s117, %s120
      %p129 = scmp.eq.s32.totalorder %s23, 1
      %p130 = por %p128, %p129
      %p131 = scmp.ne.s32.totalorder %s120, %s121
      %p132 = scmp.eq.s32.totalorder %s23, 0
      %p133 = por %p131, %p132
      %p134 = scmp.ne.s32.totalorder %s120, %s121
      %p135 = scmp.eq.s32.totalorder %s24, 1
      %p136 = por %p134, %p135
      %p138 = scmp.ne.s32.totalorder %s121, %s137
      %p139 = scmp.eq.s32.totalorder %s24, 0
      %p140 = por %p138, %p139
      %s141 = ssub.s32 %s25, %s37
      %p142 = scmp.eq.s32.totalorder %s141, 0
      %s144 = sadd.s32 %s143, 1
      %s145 = scalar_select %p142, %s143, %s144
      %p148 = pneg %p142
      %p149 = scmp.eq.s32.totalorder %s18, 1
      %p150 = por %p148, %p149
      %p151 = scmp.ne.s32.totalorder %s143, %s146
      %p152 = scmp.eq.s32.totalorder %s18, 0
      %p153 = por %p151, %p152
      %p154 = scmp.ne.s32.totalorder %s143, %s146
      %p155 = scmp.eq.s32.totalorder %s23, 1
      %p156 = por %p154, %p155
      %p157 = scmp.ne.s32.totalorder %s146, %s147
      %p158 = scmp.eq.s32.totalorder %s23, 0
      %p159 = por %p157, %p158
      %p160 = scmp.ne.s32.totalorder %s146, %s147
      %p161 = scmp.eq.s32.totalorder %s24, 1
      %p162 = por %p160, %p161
      %p164 = scmp.ne.s32.totalorder %s147, %s163
      %p165 = scmp.eq.s32.totalorder %s24, 0
      %p166 = por %p164, %p165
      %s167 = ssub.s32 %s25, %s37
      %p168 = scmp.eq.s32.totalorder %s167, 0
      %s170 = sadd.s32 %s169, 1
      %s171 = scalar_select %p168, %s169, %s170
      %p174 = pneg %p168
      %p175 = scmp.eq.s32.totalorder %s18, 1
      %p176 = por %p174, %p175
      %p177 = scmp.ne.s32.totalorder %s169, %s172
      %p178 = scmp.eq.s32.totalorder %s18, 0
      %p179 = por %p177, %p178
      %p180 = scmp.ne.s32.totalorder %s169, %s172
      %p181 = scmp.eq.s32.totalorder %s23, 1
      %p182 = por %p180, %p181
      %p183 = scmp.ne.s32.totalorder %s172, %s173
      %p184 = scmp.eq.s32.totalorder %s23, 0
      %p185 = por %p183, %p184
      %p186 = scmp.ne.s32.totalorder %s172, %s173
      %p187 = scmp.eq.s32.totalorder %s24, 1
      %p188 = por %p186, %p187
      %p190 = scmp.ne.s32.totalorder %s173, %s189
      %p191 = scmp.eq.s32.totalorder %s24, 0
      %p192 = por %p190, %p191
      %p193 = scmp.le.s32.totalorder 1, %s18
      %p194 = scmp.lt.s32.totalorder %s18, 3
      %p195 = pnand %p193, %p194
      %p196 = pneg %p195
      // Predicated region
      $region9: #{tpu_custom_call.1} parent=5 // pred_check
        _
      $region10: #{tpu_custom_call.1} parent=5 // pred_check_branch
        %198 = sbr.rel (%p195) target = $region12
      $region11: #{tpu_custom_call.1} parent=5 // pred_region
        %s199 = ssub.s32 %s18, 1
        // Predicated region
        $region13: #{tpu_custom_call.1} parent=11 // pred_check
          %p200 = pneg %p51
        $region14: #{tpu_custom_call.1} parent=11 // pred_check_branch
          %202 = sbr.rel (%p200) target = $region16
        $region15: #{tpu_custom_call.1} parent=11 // pred_region
          %204 = vsyncadd [#allocation5], 0
          %s206 = sshll.u32 %s0, 4
          %s207 = int_to_ptr.hbm [resolvable:$true] %s206
          %s208 = sshll.u32 [#allocation4], 4
          %s209 = int_to_ptr.vmem [resolvable:$true] %s208
          %211 = dma.hbm_to_vmem [thread:$0]  %s207, 64, %s209, [#allocation5]
        $region16: #{tpu_custom_call.1} parent=11 // pred_fallthru
          _
      $region12: #{tpu_custom_call.1} parent=5 // pred_fallthru
        _
      %p212 = scmp.lt.s32.totalorder %s18, 2
      // Predicated region
      $region17: #{tpu_custom_call.1} parent=5 // pred_check
        %p213 = pneg %p212
      $region18: #{tpu_custom_call.1} parent=5 // pred_check_branch
        %215 = sbr.rel (%p213) target = $region20
      $region19: #{tpu_custom_call.1} parent=5 // pred_region
        // Predicated region
        $region21: #{tpu_custom_call.1} parent=19 // pred_check
          %p216 = pneg %p73
        $region22: #{tpu_custom_call.1} parent=19 // pred_check_branch
          %218 = sbr.rel (%p216) target = $region24
        $region23: #{tpu_custom_call.1} parent=19 // pred_region
          %s219 = sand.u32 %s18, 1
          %s220 = scalar_lea.sflag [#allocation7], %s219
          %s221 = sand.u32 %s63, 1
          %s222 = smul.addr %s221, 8
          %s223 = scalar_lea.vmem [#allocation6], %s222
          %225 = vsyncadd %s220, 0
          %s226 = smul.addr %s26, 2
          %s227 = smul.addr %s25, 2
          %s228 = sadd.s32 %s226, %s227
          %s229 = smul.addr %s228, 4
          %s230 = scalar_lea.hbm %s1, %s229
          %s232 = sshll.u32 %s230, 4
          %s233 = int_to_ptr.hbm [resolvable:$true] %s232
          %s234 = sshll.u32 %s223, 4
          %s235 = int_to_ptr.vmem [resolvable:$true] %s234
          %237 = dma.hbm_to_vmem [thread:$0]  %s233, 128, %s235, %s220
        $region24: #{tpu_custom_call.1} parent=19 // pred_fallthru
          _
        // Predicated region
        $region25: #{tpu_custom_call.1} parent=19 // pred_check
          %p238 = pneg %p101
        $region26: #{tpu_custom_call.1} parent=19 // pred_check_branch
          %240 = sbr.rel (%p238) target = $region28
        $region27: #{tpu_custom_call.1} parent=19 // pred_region
          %s241 = sand.u32 %s18, 1
          %s242 = scalar_lea.sflag [#allocation7], %s241
          %s243 = sand.u32 %s91, 1
          %s244 = smul.addr %s243, 8
          %s245 = scalar_lea.vmem [#allocation8], %s244
          %247 = vsyncadd %s242, 0
          %s248 = smul.addr %s26, 2
          %s249 = smul.addr %s25, 2
          %s250 = sadd.s32 %s248, %s249
          %s251 = smul.addr %s250, 4
          %s252 = scalar_lea.hbm %s2, %s251
          %s254 = sshll.u32 %s252, 4
          %s255 = int_to_ptr.hbm [resolvable:$true] %s254
          %s256 = sshll.u32 %s245, 4
          %s257 = int_to_ptr.vmem [resolvable:$true] %s256
          %259 = dma.hbm_to_vmem [thread:$0]  %s255, 128, %s257, %s242
        $region28: #{tpu_custom_call.1} parent=19 // pred_fallthru
          _
        // Predicated region
        $region29: #{tpu_custom_call.1} parent=19 // pred_check
          %p260 = pneg %p127
        $region30: #{tpu_custom_call.1} parent=19 // pred_check_branch
          %262 = sbr.rel (%p260) target = $region32
        $region31: #{tpu_custom_call.1} parent=19 // pred_region
          %s263 = sand.u32 %s18, 1
          %s264 = scalar_lea.sflag [#allocation10], %s263
          %s265 = sand.u32 %s117, 1
          %s266 = smul.addr %s265, 8
          %s267 = scalar_lea.vmem [#allocation9], %s266
          %269 = vsyncadd %s264, 0
          %s270 = smul.addr %s25, 2
          %s271 = smul.addr %s270, 4
          %s272 = scalar_lea.hbm %s3, %s271
          %s274 = sshll.u32 %s272, 4
          %s275 = int_to_ptr.hbm [resolvable:$true] %s274
          %s276 = sshll.u32 %s267, 4
          %s277 = int_to_ptr.vmem [resolvable:$true] %s276
          %279 = dma.hbm_to_vmem [thread:$0]  %s275, 128, %s277, %s264
        $region32: #{tpu_custom_call.1} parent=19 // pred_fallthru
          _
        // Predicated region
        $region33: #{tpu_custom_call.1} parent=19 // pred_check
          %p280 = pneg %p153
        $region34: #{tpu_custom_call.1} parent=19 // pred_check_branch
          %282 = sbr.rel (%p280) target = $region36
        $region35: #{tpu_custom_call.1} parent=19 // pred_region
          %s283 = sand.u32 %s18, 1
          %s284 = scalar_lea.sflag [#allocation10], %s283
          %s285 = sand.u32 %s143, 1
          %s286 = smul.addr %s285, 8
          %s287 = scalar_lea.vmem [#allocation11], %s286
          %289 = vsyncadd %s284, 0
          %s290 = smul.addr %s25, 2
          %s291 = smul.addr %s290, 4
          %s292 = scalar_lea.hbm %s4, %s291
          %s294 = sshll.u32 %s292, 4
          %s295 = int_to_ptr.hbm [resolvable:$true] %s294
          %s296 = sshll.u32 %s287, 4
          %s297 = int_to_ptr.vmem [resolvable:$true] %s296
          %299 = dma.hbm_to_vmem [thread:$0]  %s295, 128, %s297, %s284
        $region36: #{tpu_custom_call.1} parent=19 // pred_fallthru
          _
      $region20: #{tpu_custom_call.1} parent=5 // pred_fallthru
        _
      %p300 = scmp.le.s32.totalorder 1, %s18
      %p301 = scmp.lt.s32.totalorder %s18, 3
      %p302 = pnand %p300, %p301
      %p303 = pneg %p302
      // Predicated region
      $region37: #{tpu_custom_call.1} parent=5 // pred_check
        _
      $region38: #{tpu_custom_call.1} parent=5 // pred_check_branch
        %305 = sbr.rel (%p302) target = $region40
      $region39: #{tpu_custom_call.1} parent=5 // pred_region
        %s306 = ssub.s32 %s18, 1
        // Predicated region
        $region41: #{tpu_custom_call.1} parent=39 // pred_check
          %p307 = pneg %p51
        $region42: #{tpu_custom_call.1} parent=39 // pred_check_branch
          %309 = sbr.rel (%p307) target = $region44
        $region43: #{tpu_custom_call.1} parent=39 // pred_region
          %311 = dma.done [#allocation5], 64
        $region44: #{tpu_custom_call.1} parent=39 // pred_fallthru
          _
        %s312 = sand.u32 %s23, 1
        %s313 = scalar_lea.sflag [#allocation7], %s312
        %s314 = sand.u32 %s66, 1
        %s315 = smul.addr %s314, 8
        %s316 = scalar_lea.vmem [#allocation6], %s315
        // Predicated region
        $region45: #{tpu_custom_call.1} parent=39 // pred_check
          %p317 = pneg %p79
        $region46: #{tpu_custom_call.1} parent=39 // pred_check_branch
          %319 = sbr.rel (%p317) target = $region48
        $region47: #{tpu_custom_call.1} parent=39 // pred_region
          %321 = dma.done %s313, 128
        $region48: #{tpu_custom_call.1} parent=39 // pred_fallthru
          _
        %s322 = sand.u32 %s23, 1
        %s323 = scalar_lea.sflag [#allocation7], %s322
        %s324 = sand.u32 %s94, 1
        %s325 = smul.addr %s324, 8
        %s326 = scalar_lea.vmem [#allocation8], %s325
        // Predicated region
        $region49: #{tpu_custom_call.1} parent=39 // pred_check
          %p327 = pneg %p107
        $region50: #{tpu_custom_call.1} parent=39 // pred_check_branch
          %329 = sbr.rel (%p327) target = $region52
        $region51: #{tpu_custom_call.1} parent=39 // pred_region
          %331 = dma.done %s323, 128
        $region52: #{tpu_custom_call.1} parent=39 // pred_fallthru
          _
        %s332 = sand.u32 %s23, 1
        %s333 = scalar_lea.sflag [#allocation10], %s332
        %s334 = sand.u32 %s120, 1
        %s335 = smul.addr %s334, 8
        %s336 = scalar_lea.vmem [#allocation9], %s335
        // Predicated region
        $region53: #{tpu_custom_call.1} parent=39 // pred_check
          %p337 = pneg %p133
        $region54: #{tpu_custom_call.1} parent=39 // pred_check_branch
          %339 = sbr.rel (%p337) target = $region56
        $region55: #{tpu_custom_call.1} parent=39 // pred_region
          %341 = dma.done %s333, 128
        $region56: #{tpu_custom_call.1} parent=39 // pred_fallthru
          _
        %s342 = sand.u32 %s23, 1
        %s343 = scalar_lea.sflag [#allocation10], %s342
        %s344 = sand.u32 %s146, 1
        %s345 = smul.addr %s344, 8
        %s346 = scalar_lea.vmem [#allocation11], %s345
        // Predicated region
        $region57: #{tpu_custom_call.1} parent=39 // pred_check
          %p347 = pneg %p159
        $region58: #{tpu_custom_call.1} parent=39 // pred_check_branch
          %349 = sbr.rel (%p347) target = $region60
        $region59: #{tpu_custom_call.1} parent=39 // pred_region
          %351 = dma.done %s343, 128
        $region60: #{tpu_custom_call.1} parent=39 // pred_fallthru
          _
        %p352 = pneg %p51
        %p353 = pneg %p48
        %s354 = sand.u32 %s23, 1
        %s355 = scalar_lea.sflag [#allocation7], %s354
        %s356 = sand.u32 %s66, 1
        %s357 = smul.addr %s356, 8
        %s358 = scalar_lea.vmem [#allocation6], %s357
        %p359 = pneg %p79
        %p360 = pneg %p76
        %s361 = sand.u32 %s23, 1
        %s362 = scalar_lea.sflag [#allocation7], %s361
        %s363 = sand.u32 %s94, 1
        %s364 = smul.addr %s363, 8
        %s365 = scalar_lea.vmem [#allocation8], %s364
        %p366 = pneg %p107
        %p367 = pneg %p104
        %s368 = sand.u32 %s23, 1
        %s369 = scalar_lea.sflag [#allocation10], %s368
        %s370 = sand.u32 %s120, 1
        %s371 = smul.addr %s370, 8
        %s372 = scalar_lea.vmem [#allocation9], %s371
        %p373 = pneg %p133
        %p374 = pneg %p130
        %s375 = sand.u32 %s23, 1
        %s376 = scalar_lea.sflag [#allocation10], %s375
        %s377 = sand.u32 %s146, 1
        %s378 = smul.addr %s377, 8
        %s379 = scalar_lea.vmem [#allocation11], %s378
        %p380 = pneg %p159
        %p381 = pneg %p156
        %p382 = pneg %p185
        %p383 = pneg %p182
        %p384 = scmp.lt.s32.totalorder %s27, 1
        %s385 = scalar_select %p384, %s27, 1
        %s386 = smul.addr %s385, 4
        %s387 = scalar_lea.vmem %s5, %s386
        %p388 = scmp.lt.s32.totalorder %s27, 1
        %s389 = scalar_select %p388, %s27, 1
        %s390 = smul.addr %s389, 4
        %s391 = scalar_lea.vmem %s5, %s390
        %p392 = scmp.eq.s32.totalorder %s28, 0
        // Predicated region
        $region61: #{tpu_custom_call.1} parent=39 // pred_check
          %p393 = pneg %p392
        $region62: #{tpu_custom_call.1} parent=39 // pred_check_branch
          %395 = sbr.rel (%p393) target = $region64
        $region63: #{tpu_custom_call.1} parent=39 // pred_region
          %396 = vst [vmem:[#allocation2] sm:$0xff] 0.0
          %v397 = vlaneseq
          %vm398 = vcmp.ge.s32.totalorder %v397, 0
          %vm399 = vcmp.lt.s32.totalorder %v397, 256
          %vm400 = vmand %vm398, %vm399
          %401 = vst.msk [vmem:[#allocation3] sm:$0x3] %vm400, 0.0
        $region64: #{tpu_custom_call.1} parent=39 // pred_fallthru
          _
        %v402 = vld [vmem:[%s316] sm:$0xff]
        %v403 = vld [vmem:[%s326] sm:$0xff]
        %v404 = vmul.f32 %v402, 0.01
        %v405 = vmax.f32 %v402, %v404
        %v406 = vmul.f32 %v403, 0.01
        %v407 = vmax.f32 %v403, %v406
        %v408 = vsub.f32 %v405, %v407
        %v409 = vld [vmem:[#allocation2] sm:$0xff]
        %v410 = vmul.f32 %v408, %v408
        %v411 = vadd.f32 %v409, %v410
        %412 = vst [vmem:[#allocation2] sm:$0xff] %v411
        %v413 = vmax.f32 %v403, 0.0
        %v414 = vld [vmem:[#allocation4] ss:$2 sm:$0x3]
        %s415 = scalar_lea.vmem [#allocation4], 1
        %v416 = vld [vmem:[%s415] ss:$2 sm:$0x3]
        %vm417 = vcmp.ne.s32.totalorder %v414, 0
        %419 = vst [vmem:[#allocation1] ss:$2 sm:$0xff] %v413
        %v420 = vld.sshfl [vmem:[#allocation1] sm:$0xff pattern:$0x75316420]
        %v421 = vld.sshfl [vmem:[#allocation1 + $0x8] sm:$0xff pattern:$0x75316420]
        %424 = vrot.lane.b32.xlu0 %v420, 1
        %v425 = vpop.permute.xlu0 %424
        %426 = vrot.lane.b32.xlu0 %v421, 1
        %v427 = vpop.permute.xlu0 %426
        %v428 = vlaneseq
        %v429 = vand.u32 %v428, 127
        %vm430 = vcmp.lt.s32.totalorder %v429, 1
        %v431 = vsel %vm430, %v425, %v427
        %v432 = vsel %vm430, %v427, %v425
        %v433 = vsel %vm417, 1, 0
        %v434 = vperm.slane %v433, 0
        %v435 = vperm.slane %v433, 1
        %vm436 = vcmp.eq.s32.totalorder %v434, 1
        %vm437 = vcmp.eq.s32.totalorder %v435, 1
        %v438 = vsel %vm436, %v432, 0.0
        %v439 = vsel %vm437, %v431, 0.0
        %vm440 = vcmp.ne.s32.totalorder %v414, 15
        %441 = vst [vmem:[#allocation1] ss:$2 sm:$0xff] %v413
        %v442 = vld.sshfl [vmem:[#allocation1] sm:$0xff pattern:$0x75316420]
        %v443 = vld.sshfl [vmem:[#allocation1 + $0x8] sm:$0xff pattern:$0x75316420]
        %446 = vrot.lane.b32.xlu0 %v442, 127
        %v447 = vpop.permute.xlu0 %446
        %448 = vrot.lane.b32.xlu0 %v443, 127
        %v449 = vpop.permute.xlu0 %448
        %vm450 = vcmp.lt.s32.totalorder %v429, 127
        %v451 = vsel %vm450, %v447, %v449
        %v452 = vsel %vm450, %v449, %v447
        %v453 = vsel %vm440, 1, 0
        %v454 = vperm.slane %v453, 0
        %v455 = vperm.slane %v453, 1
        %vm456 = vcmp.eq.s32.totalorder %v454, 1
        %vm457 = vcmp.eq.s32.totalorder %v455, 1
        %v458 = vsel %vm456, %v451, 0.0
        %v459 = vsel %vm457, %v452, 0.0
        %v460 = vmax.f32 %v438, %v458
        %v461 = vmax.f32 %v439, %v459
        %v464 = vrot.slane %v461, 4
        %vm465 = vcmask 1043456
        %v466 = vsel %vm465, %v460, %v464
        %v468 = vmax.f32 %v413, %v466
        %vm469 = vcmp.ne.s32.totalorder %v416, 0
        %471 = vst [vmem:[#allocation1] ss:$2 sm:$0xff] %v468
        %v472 = vld.sshfl [vmem:[#allocation1] sm:$0xff pattern:$0x75316420]
        %v473 = vld.sshfl [vmem:[#allocation1 + $0x8] sm:$0xff pattern:$0x75316420]
        %476 = vrot.lane.b32.xlu0 %v472, 16
        %v477 = vpop.permute.xlu0 %476
        %478 = vrot.lane.b32.xlu0 %v473, 16
        %v479 = vpop.permute.xlu0 %478
        %vm480 = vcmp.lt.s32.totalorder %v429, 16
        %v481 = vsel %vm480, %v477, %v479
        %v482 = vsel %vm480, %v479, %v477
        %v483 = vsel %vm469, 1, 0
        %v484 = vperm.slane %v483, 0
        %v485 = vperm.slane %v483, 1
        %vm486 = vcmp.eq.s32.totalorder %v484, 1
        %vm487 = vcmp.eq.s32.totalorder %v485, 1
        %v488 = vsel %vm486, %v482, 0.0
        %v489 = vsel %vm487, %v481, 0.0
        %vm490 = vcmp.ne.s32.totalorder %v416, 15
        %491 = vst [vmem:[#allocation1] ss:$2 sm:$0xff] %v468
        %v492 = vld.sshfl [vmem:[#allocation1] sm:$0xff pattern:$0x75316420]
        %v493 = vld.sshfl [vmem:[#allocation1 + $0x8] sm:$0xff pattern:$0x75316420]
        %496 = vrot.lane.b32.xlu0 %v492, 112
        %v497 = vpop.permute.xlu0 %496
        %498 = vrot.lane.b32.xlu0 %v493, 112
        %v499 = vpop.permute.xlu0 %498
        %vm500 = vcmp.lt.s32.totalorder %v429, 112
        %v501 = vsel %vm500, %v497, %v499
        %v502 = vsel %vm500, %v499, %v497
        %v503 = vsel %vm490, 1, 0
        %v504 = vperm.slane %v503, 0
        %v505 = vperm.slane %v503, 1
        %vm506 = vcmp.eq.s32.totalorder %v504, 1
        %vm507 = vcmp.eq.s32.totalorder %v505, 1
        %v508 = vsel %vm506, %v501, 0.0
        %v509 = vsel %vm507, %v502, 0.0
        %v510 = vmax.f32 %v488, %v508
        %v511 = vmax.f32 %v489, %v509
        %v514 = vrot.slane %v511, 4
        %v515 = vsel %vm465, %v510, %v514
        %v517 = vmax.f32 %v468, %v515
        %vm518 = vcmp.eq.f32.partialorder %v517, %v413
        %v519 = vsel %vm518, %v413, 0.0
        %v520 = vld [vmem:[#allocation3] sm:$0x3]
        %522 = vst [vmem:[#allocation1] ss:$2 sm:$0xff] %v519
        %v523 = vld.sshfl [vmem:[#allocation1] sm:$0xff pattern:$0x75316420]
        %v524 = vld.sshfl [vmem:[#allocation1 + $0x8] sm:$0xff pattern:$0x75316420]
        %v527 = vsel %vm465, %v523, -inf
        %v528 = vrot.slane %v527, 4
        %v529 = vmax.f32 %v527, %v528
        %v530 = vrot.slane %v529, 2
        %v531 = vmax.f32 %v529, %v530
        %v532 = vrot.slane %v531, 1
        %v533 = vmax.f32 %v531, %v532
        %v534 = vsel %vm465, %v524, -inf
        %v535 = vrot.slane %v534, 4
        %v536 = vmax.f32 %v534, %v535
        %v537 = vrot.slane %v536, 2
        %v538 = vmax.f32 %v536, %v537
        %v539 = vrot.slane %v538, 1
        %v540 = vmax.f32 %v538, %v539
        %v543 = vrot.slane %v540, 7
        %vm544 = vcmask 1040384
        %v545 = vsel %vm544, %v533, %v543
        %v547 = vmax.f32 %v520, %v545
        %v548 = vlaneseq
        %vm549 = vcmp.ge.s32.totalorder %v548, 0
        %vm550 = vcmp.lt.s32.totalorder %v548, 256
        %vm551 = vmand %vm549, %vm550
        %552 = vst.msk [vmem:[#allocation3] sm:$0x3] %vm551, %v547
        // Predicated region
        $region65: #{tpu_custom_call.1} parent=39 // pred_check
          %p553 = pneg %p392
        $region66: #{tpu_custom_call.1} parent=39 // pred_check_branch
          %555 = sbr.rel (%p553) target = $region68
        $region67: #{tpu_custom_call.1} parent=39 // pred_region
          %v556 = vld [vmem:[#allocation3] sm:$0x3]
          %v557 = vld [vmem:[%s336] sm:$0xff]
          %v558 = vld [vmem:[%s346] sm:$0xff]
          %560 = vst [vmem:[#allocation1] ss:$2 sm:$0xff] %v558
          %v561 = vld.sshfl [vmem:[#allocation1] sm:$0xff pattern:$0x75316420]
          %v562 = vld.sshfl [vmem:[#allocation1 + $0x8] sm:$0xff pattern:$0x75316420]
          %v565 = vsel %vm465, %v561, 0.0
          %v566 = vrot.slane %v565, 4
          %v567 = vadd.f32 %v565, %v566
          %v568 = vrot.slane %v567, 2
          %v569 = vadd.f32 %v567, %v568
          %v570 = vrot.slane %v569, 1
          %v571 = vadd.f32 %v569, %v570
          %v572 = vsel %vm465, %v562, 0.0
          %v573 = vrot.slane %v572, 4
          %v574 = vadd.f32 %v572, %v573
          %v575 = vrot.slane %v574, 2
          %v576 = vadd.f32 %v574, %v575
          %v577 = vrot.slane %v576, 1
          %v578 = vadd.f32 %v576, %v577
          %v579 = vmul.f32 %v571, 0.5
          %v580 = vmul.f32 %v578, 0.5
          %v581 = vadd.f32 %v579, 0.0001
          %v582 = vadd.f32 %v580, 0.0001
          %v583 = vrcp.pop %v581
          %v584 = vmul.f32 %v581, %v583
          %v585 = vsub.f32 1.0, %v584
          %v586 = vmul.f32 %v583, %v585
          %v587 = vadd.f32 %v583, %v586
          %vm588 = vweird.f32 %v581
          %vm589 = vweird.f32 %v583
          %vm590 = vmor %vm588, %vm589
          %v591 = vsel %vm590, %v583, %v587
          %v592 = vand.u32 2147483647, %v581
          %vm593 = vcmp.eq.f32.partialorder %v592, 8.507059e+37
          %v594 = vand.u32 %v581, 2147483648
          %v595 = vor.u32 1.1754944e-38, %v594
          %v596 = vsel %vm593, %v595, %v591
          %v597 = vrcp.pop %v582
          %v598 = vmul.f32 %v582, %v597
          %v599 = vsub.f32 1.0, %v598
          %v600 = vmul.f32 %v597, %v599
          %v601 = vadd.f32 %v597, %v600
          %vm602 = vweird.f32 %v582
          %vm603 = vweird.f32 %v597
          %vm604 = vmor %vm602, %vm603
          %v605 = vsel %vm604, %v597, %v601
          %v606 = vand.u32 2147483647, %v582
          %vm607 = vcmp.eq.f32.partialorder %v606, 8.507059e+37
          %v608 = vand.u32 %v582, 2147483648
          %v609 = vor.u32 1.1754944e-38, %v608
          %v610 = vsel %vm607, %v609, %v605
          %v613 = vrot.slane %v610, 7
          %v614 = vsel %vm544, %v596, %v613
          %v616 = vmul.f32 %v556, %v614
          %v617 = vsub.f32 %v557, %v558
          %v619 = vperm.slane %v616, 0
          %v620 = vperm.slane %v616, 1
          %v621 = vrot.slane %v620, 4
          %v622 = vsel %vm465, %v619, %v621
          %v624 = vmul.f32 %v617, %v622
          %v625 = vand.u32 2147483647, %v624
          %627 = vst [vmem:[#allocation1] ss:$2 sm:$0xff] %v625
          %v628 = vld.sshfl [vmem:[#allocation1] sm:$0xff pattern:$0x75316420]
          %v629 = vld.sshfl [vmem:[#allocation1 + $0x8] sm:$0xff pattern:$0x75316420]
          %v632 = vsel %vm465, %v628, 0.0
          %v633 = vsel %vm465, %v629, 0.0
          %v634 = vadd.f32 %v632, %v633
          %635 = vadd.xlane.f32.xlu0 %v634
          %v636 = vpop.xlane.xlu0 %635
          %v637 = vrot.slane %v636, 4
          %v638 = vadd.f32 %v636, %v637
          %v639 = vrot.slane %v638, 2
          %v640 = vadd.f32 %v638, %v639
          %v641 = vrot.slane %v640, 1
          %v642 = vadd.f32 %v640, %v641
          %s643 = vtos %v642
          %v644 = vld [vmem:[#allocation2] sm:$0xff]
          %646 = vst [vmem:[#allocation1] ss:$2 sm:$0xff] %v644
          %v647 = vld.sshfl [vmem:[#allocation1] sm:$0xff pattern:$0x75316420]
          %v648 = vld.sshfl [vmem:[#allocation1 + $0x8] sm:$0xff pattern:$0x75316420]
          %v651 = vsel %vm465, %v647, 0.0
          %v652 = vsel %vm465, %v648, 0.0
          %v653 = vadd.f32 %v651, %v652
          %654 = vadd.xlane.f32.xlu0 %v653
          %v655 = vpop.xlane.xlu0 %654
          %v656 = vrot.slane %v655, 4
          %v657 = vadd.f32 %v655, %v656
          %v658 = vrot.slane %v657, 2
          %v659 = vadd.f32 %v657, %v658
          %v660 = vrot.slane %v659, 1
          %v661 = vadd.f32 %v659, %v660
          %s662 = vtos %v661
          %v664 = vperm.slane %v556, 0
          %v665 = vperm.slane %v556, 1
          %v668 = vsel %vm544, %v664, 0.0
          %v669 = vsel %vm544, %v665, 0.0
          %v670 = vadd.f32 %v668, %v669
          %671 = vadd.xlane.f32.xlu0 %v670
          %v672 = vpop.xlane.xlu0 %671
          %v673 = vrot.slane %v672, 4
          %v674 = vadd.f32 %v672, %v673
          %v675 = vrot.slane %v674, 2
          %v676 = vadd.f32 %v674, %v675
          %v677 = vrot.slane %v676, 1
          %v678 = vadd.f32 %v676, %v677
          %s679 = vtos %v678
          %v680 = vstv %s662
          %681 = vst [vmem:[%s391] sm:$0x1] %v680
          %v682 = vstv %s643
          %683 = vst [vmem:[%s391 + $0x1] sm:$0x1] %v682
          %v684 = vstv %s679
          %685 = vst [vmem:[%s391 + $0x2] sm:$0x1] %v684
        $region68: #{tpu_custom_call.1} parent=39 // pred_fallthru
          _
        %p686 = scmp.lt.s32.totalorder %s27, 1
        %s687 = scalar_select %p686, %s27, 1
        %s688 = smul.addr %s687, 4
        %s689 = scalar_lea.vmem %s5, %s688
        // Predicated region
        $region69: #{tpu_custom_call.1} parent=39 // pred_check
          %p690 = pneg %p182
        $region70: #{tpu_custom_call.1} parent=39 // pred_check_branch
          %692 = sbr.rel (%p690) target = $region72
        $region71: #{tpu_custom_call.1} parent=39 // pred_region
          _
        $region72: #{tpu_custom_call.1} parent=39 // pred_fallthru
          _
      $region40: #{tpu_custom_call.1} parent=5 // pred_fallthru
        _
      %p693 = scmp.le.s32.totalorder 2, %s18
      // Predicated region
      $region73: #{tpu_custom_call.1} parent=5 // pred_check
        %p694 = pneg %p693
      $region74: #{tpu_custom_call.1} parent=5 // pred_check_branch
        %696 = sbr.rel (%p694) target = $region76
      $region75: #{tpu_custom_call.1} parent=5 // pred_region
        %s697 = ssub.s32 %s18, 2
        // Predicated region
        $region77: #{tpu_custom_call.1} parent=75 // pred_check
          %p698 = pneg %p188
        $region78: #{tpu_custom_call.1} parent=75 // pred_check_branch
          %700 = sbr.rel (%p698) target = $region80
        $region79: #{tpu_custom_call.1} parent=75 // pred_region
          %p701 = scmp.lt.s32.totalorder %s29, 1
          %s702 = scalar_select %p701, %s29, 1
          %s703 = smul.addr %s702, 4
          %s704 = scalar_lea.vmem %s5, %s703
        $region80: #{tpu_custom_call.1} parent=75 // pred_fallthru
          _
      $region76: #{tpu_custom_call.1} parent=5 // pred_fallthru
        _
    $region6: #{tpu_custom_call.1} parent=1 // loop_footer
      %s22 = sadd.s32 1, %s18
    $region7: #{tpu_custom_call.1} parent=1 // loop_footer_branch
      %17 = sbr.rel target = $region3
    $region8: #{tpu_custom_call.1} parent=1 // loop_exit
      _
    %705 = vsyncpa [#allocation5], 1
    %s706 = scalar_lea.sflag [#allocation5], 1
    %707 = vsyncpa %s706, 1
    %708 = vsyncpa [#allocation7], 1
    %s709 = scalar_lea.sflag [#allocation7], 1
    %710 = vsyncpa %s709, 1
    %711 = vsyncpa [#allocation10], 1
    %s712 = scalar_lea.sflag [#allocation10], 1
    %713 = vsyncpa %s712, 1

</llo_original>
